<compile_context>
chip_gen: v7x
topology: tpu7x:2x2x1
jax: 0.10.0
libtpu: 0.0.40
codegen_flags: <defaults>
</compile_context>

<pallas_src>
import functools
import math

import jax
import jax.numpy as jnp
from jax.experimental import pallas as pl
from jax.experimental.pallas import tpu as pltpu


def _wrapped_cart2polar_kernel(x_ref, o_ref, *, r_mod, r_off):
    # x_ref / o_ref: (bt, 2, st, 128) VMEM tiles; channel 0 = x, channel 1 = y.
    blk = x_ref[...].astype(jnp.float32)           # one dense load of the block
    x = blk[:, 0]                                  # (bt, st, 128)
    y = blk[:, 1]
    r = jnp.sqrt(x * x + y * y)                    # VPU elementwise
    a = jnp.arctan2(y, x)                          # exact torch.atan2 parity
    k = jnp.ceil((r + r_off) / r_mod)              # exact divide (wrap index)
    a = a - (2.0 * math.pi) * k
    o_ref[...] = jnp.stack([r, a], axis=1).astype(o_ref.dtype)


def wrapped_cart2polar(X, r_mod=2.0, r_off=-1.5, bytes_per_block=2 << 20):
    B, C, H, W = X.shape
    assert C == 2, "WrappedCart2Polar expects 2 channels (x, y)"
    HW = H * W
    itemsize = jnp.dtype(X.dtype).itemsize

    # ---- lane/sublane-dense folding of the flattened spatial axis --------
    if HW % 128 == 0:
        HW_pad = HW
    else:
        HW_pad = ((HW + 1023) // 1024) * 1024      # pad to a multiple of 8*128
    rows = HW_pad // 128

    Xf = X.reshape(B, 2, HW)
    if HW_pad != HW:
        Xf = jnp.pad(Xf, ((0, 0), (0, 0), (0, HW_pad - HW)))
    Xr = Xf.reshape(B, 2, rows, 128)

    # ---- byte-budgeted block sizing ---------------------------------------
    # Target ~bytes_per_block of *input* per grid step (same again for output).
    budget_rows = max(8, bytes_per_block // (2 * 128 * itemsize))
    if rows >= budget_rows:
        st = (budget_rows // 8) * 8                # multiple of 8 -> dense tiles
        bt = 1
    else:
        st = rows                                  # full extent of folded axis
        bt = min(B, max(1, budget_rows // rows))   # widen batch dim to budget

    # ---- guarantee >=2 grid steps so both v7x TensorCores get work --------
    if pl.cdiv(B, bt) * pl.cdiv(rows, st) < 2:
        if B >= 2:
            bt = pl.cdiv(B, 2)
        elif rows >= 16:
            st = max(8, ((rows // 2) // 8) * 8)

    grid = (pl.cdiv(B, bt), pl.cdiv(rows, st))
    block = (bt, 2, st, 128)
    index_map = lambda b, s: (b, 0, s, 0)

    kernel = functools.partial(
        _wrapped_cart2polar_kernel, r_mod=float(r_mod), r_off=float(r_off))

    out = pl.pallas_call(
        kernel,
        out_shape=jax.ShapeDtypeStruct((B, 2, rows, 128), X.dtype),
        grid=grid,
        in_specs=[pl.BlockSpec(block, index_map)],
        out_specs=pl.BlockSpec(block, index_map),
        compiler_params=pltpu.CompilerParams(
            dimension_semantics=("parallel", "parallel"),
            vmem_limit_bytes=32 << 20),
    )(Xr)

    out = out.reshape(B, 2, HW_pad)
    if HW_pad != HW:
        out = out[:, :, :HW]
    return out.reshape(B, 2, H, W)


if __name__ == "__main__":
    keys = jax.random.split(jax.random.PRNGKey(0), 2)

    def reference(X, r_mod=2.0, r_off=-1.5):
        x, y = X[:, 0], X[:, 1]
        r = jnp.sqrt(x * x + y * y)
        a = jnp.arctan2(y, x) - 2.0 * math.pi * jnp.ceil((r + r_off) / r_mod)
        return jnp.stack([r, a], axis=1)

    # Main case: small batch of 16x16 two-channel (x, y) maps.
    X = jax.random.normal(keys[0], (2, 2, 16, 16), dtype=jnp.float32)
    out = jax.block_until_ready(wrapped_cart2polar(X))
    ref = reference(X)
    assert out.shape == X.shape
    assert jnp.allclose(out, ref, atol=1e-5, rtol=1e-5), (
        float(jnp.max(jnp.abs(out - ref))))

    # Non-multiple-of-128 spatial size: exercises the pad-to-(8*128) path.
    X2 = jax.random.normal(keys[1], (1, 2, 7, 9), dtype=jnp.float32)
    out2 = jax.block_until_ready(wrapped_cart2polar(X2))
    ref2 = reference(X2)
    assert out2.shape == X2.shape
    assert jnp.allclose(out2, ref2, atol=1e-5, rtol=1e-5), (
        float(jnp.max(jnp.abs(out2 - ref2))))

    print("KERNEL_OK")
</pallas_src>

<mosaic_0001>
module attributes {stable_mosaic.version = 11 : i64} {
  func.func @_wrapped_cart2polar_kernel(%arg0: i32, %arg1: i32, %arg2: memref<1x2x2x128xf32, #tpu.memory_space<vmem>>, %arg3: memref<1x2x2x128xf32, #tpu.memory_space<vmem>>) attributes {dimension_semantics = [#tpu.dimension_semantics<parallel>, #tpu.dimension_semantics<parallel>], iteration_bounds = array<i64: 2, 1>, scalar_prefetch = 0 : i64, scratch_operands = 0 : i64, tpu.core_type = #tpu.core_type<tc>, window_params = [{transform_indices = @transform_0, window_bounds = array<i64: 1, 2, 2, 128>}, {transform_indices = @transform_1, window_bounds = array<i64: 1, 2, 2, 128>}]} {
    %c0 = arith.constant 0 : index
    %c0_0 = arith.constant 0 : index
    %c0_1 = arith.constant 0 : index
    %c0_2 = arith.constant 0 : index
    %0 = vector.load %arg2[%c0, %c0_0, %c0_1, %c0_2] : memref<1x2x2x128xf32, #tpu.memory_space<vmem>>, vector<1x2x2x128xf32>
    %1 = vector.extract_strided_slice %0 {offsets = [0, 0, 0, 0], sizes = [1, 1, 2, 128], strides = [1, 1, 1, 1]} : vector<1x2x2x128xf32> to vector<1x1x2x128xf32>
    %2 = vector.shape_cast %1 : vector<1x1x2x128xf32> to vector<1x2x128xf32>
    %3 = vector.extract_strided_slice %0 {offsets = [0, 1, 0, 0], sizes = [1, 1, 2, 128], strides = [1, 1, 1, 1]} : vector<1x2x2x128xf32> to vector<1x1x2x128xf32>
    %4 = vector.shape_cast %3 : vector<1x1x2x128xf32> to vector<1x2x128xf32>
    %5 = arith.mulf %2, %2 : vector<1x2x128xf32>
    %6 = arith.mulf %4, %4 : vector<1x2x128xf32>
    %7 = arith.addf %5, %6 : vector<1x2x128xf32>
    %8 = math.sqrt %7 : vector<1x2x128xf32>
    %9 = math.atan2 %4, %2 : vector<1x2x128xf32>
    %cst = arith.constant -1.500000e+00 : f32
    %10 = vector.broadcast %cst : f32 to vector<1x2x128xf32>
    %11 = arith.addf %8, %10 : vector<1x2x128xf32>
    %cst_3 = arith.constant 2.000000e+00 : f32
    %12 = vector.broadcast %cst_3 : f32 to vector<1x2x128xf32>
    %13 = arith.divf %11, %12 : vector<1x2x128xf32>
    %14 = math.ceil %13 : vector<1x2x128xf32>
    %cst_4 = arith.constant 6.28318548 : f32
    %15 = vector.broadcast %cst_4 : f32 to vector<1x2x128xf32>
    %16 = arith.mulf %15, %14 : vector<1x2x128xf32>
    %17 = arith.subf %9, %16 : vector<1x2x128xf32>
    %18 = vector.shape_cast %8 : vector<1x2x128xf32> to vector<1x1x2x128xf32>
    %19 = vector.shape_cast %17 : vector<1x2x128xf32> to vector<1x1x2x128xf32>
    %20 = tpu.concatenate %18, %19 in 1 : vector<1x1x2x128xf32>, vector<1x1x2x128xf32> -> vector<1x2x2x128xf32>
    %c0_5 = arith.constant 0 : index
    %c0_6 = arith.constant 0 : index
    %c0_7 = arith.constant 0 : index
    %c0_8 = arith.constant 0 : index
    %21 = vector.load %arg3[%c0_5, %c0_6, %c0_7, %c0_8] : memref<1x2x2x128xf32, #tpu.memory_space<vmem>>, vector<1x2x2x128xf32>
    tpu.vector_store %arg3[%c0_5, %c0_6, %c0_7, %c0_8], %20 {strides = array<i32>} : memref<1x2x2x128xf32, #tpu.memory_space<vmem>>, vector<1x2x2x128xf32>,
    return
  }
  func.func @transform_0(%arg0: i32, %arg1: i32) -> (i32, i32, i32, i32) {
    %c0_i32 = arith.constant 0 : i32
    %c0_i32_0 = arith.constant 0 : i32
    %c0_i32_1 = arith.constant 0 : i32
    return %arg0, %c0_i32, %arg1, %c0_i32_0 : i32, i32, i32, i32
  }
  func.func @transform_1(%arg0: i32, %arg1: i32) -> (i32, i32, i32, i32) {
    %c0_i32 = arith.constant 0 : i32
    %c0_i32_0 = arith.constant 0 : i32
    %c0_i32_1 = arith.constant 0 : i32
    return %arg0, %c0_i32, %arg1, %c0_i32_0 : i32, i32, i32, i32
  }
}

</mosaic_0001>

<llo_original>
// kernel: tpu_custom_call.1
$region0: #{tpu_custom_call.1}
  #allocation0 [shape = 'u32[]', space=smem, size = 0x4, offset = 0x4, fixed_abs, tag = 'smem constant byte address 0x4 - core index']
  #allocation1 [shape = 'u32[144,128]{1,0:T(1,128)}', space=vmem, size = 0x12000, scoped, tag = 'internal scratch']
  %s0 = inlined_call_operand.hbm [shape: f32[2,2,2,128], index: 0, kind: input, shape index: {}]
  %s1 = inlined_call_operand.hbm [shape: f32[2,2,2,128], index: 1, kind: output, shape index: {}]
  %s2 = sld [smem:[#allocation0]]
  $region41: #{tpu_custom_call.1} parent=0
    _
  %s4 = ssub.s32 1, %s2
  %s5 = scalar_select 0, %s4, %s2
  $region1: #{tpu_custom_call.1} parent=0
    #allocation2 [shape = 'u8[4096]{0}', space=vmem, size = 0x1000, scoped, tag = 'input window, operand 0']
    #allocation3 [shape = 's32[2]{0}', space=sflag, size = 0x8, scoped, tag = 'scoped memory for tpu_custom_call.1']
    #allocation4 [shape = 's32[2]{0}', space=sflag, size = 0x8, scoped, tag = 'scoped memory for tpu_custom_call.1']
    #allocation5 [shape = 'u8[4096]{0}', space=vmem, size = 0x1000, scoped, tag = 'output window, operand 0']
    %6 = vsyncpa [#allocation3], 0
    %s7 = scalar_lea.sflag [#allocation3], 1
    %8 = vsyncpa %s7, 0
    %9 = vsyncpa [#allocation4], 0
    %s10 = scalar_lea.sflag [#allocation4], 1
    %11 = vsyncpa %s10, 0
    loop: start=0, step=1, limit=4
    $region2: #{tpu_custom_call.1} parent=1 // loop_pre_header
      _
    $region3: #{tpu_custom_call.1} parent=1 // loop_header
      %s13 = sphi 0, %s17
      %p14 = scmp.ge.s32.totalorder %s13, 4
      %s20 = sphi 0, %s32
      %s21 = sphi 0, %s28
      %s22 = sphi 0, %s20
      %s23 = sphi 0, %s21
      %s24 = sphi 0, %s22
      %s25 = sphi 0, %s23
      %s37 = sphi 0, %s39
      %s40 = sphi 0, %s37
      %s41 = sphi 0, %s40
      %s57 = sphi 0, %s41
      %s65 = sphi 0, %s67
      %s68 = sphi 0, %s65
      %s69 = sphi 0, %s68
      %s85 = sphi 0, %s69
    $region4: #{tpu_custom_call.1} parent=1 // loop_header_branch
      %16 = sbr.rel (%p14) target = $region8
    $region5: #{tpu_custom_call.1} parent=1 // loop_body
      %s18 = ssub.s32 %s13, 1
      %s19 = ssub.s32 %s13, 2
      %s26 = sadd.s32 1, %s21
      %p27 = scmp.ge.s32.totalorder %s26, 1
      %s28 = scalar_select %p27, 0, %s26
      %s29 = sadd.s32 1, %s20
      %s30 = scalar_select %p27, %s29, %s20
      %p31 = scmp.ge.s32.totalorder %s30, 2
      %s32 = scalar_select %p31, 0, %s30
      %s33 = ssub.s32 %s20, %s32
      %s34 = ssub.s32 %s21, %s28
      %s35 = sor.u32 %s33, %s34
      %p36 = scmp.eq.s32.totalorder %s35, 0
      %s38 = sadd.s32 %s37, 1
      %s39 = scalar_select %p36, %s37, %s38
      %p42 = pneg %p36
      %p43 = scmp.eq.s32.totalorder %s13, 1
      %p44 = por %p42, %p43
      %p45 = scmp.ne.s32.totalorder %s37, %s40
      %p46 = scmp.eq.s32.totalorder %s13, 0
      %p47 = por %p45, %p46
      %p48 = scmp.ne.s32.totalorder %s37, %s40
      %p49 = scmp.eq.s32.totalorder %s18, 1
      %p50 = por %p48, %p49
      %p51 = scmp.ne.s32.totalorder %s40, %s41
      %p52 = scmp.eq.s32.totalorder %s18, 0
      %p53 = por %p51, %p52
      %p54 = scmp.ne.s32.totalorder %s40, %s41
      %p55 = scmp.eq.s32.totalorder %s19, 1
      %p56 = por %p54, %p55
      %p58 = scmp.ne.s32.totalorder %s41, %s57
      %p59 = scmp.eq.s32.totalorder %s19, 0
      %p60 = por %p58, %p59
      %s61 = ssub.s32 %s20, %s32
      %s62 = ssub.s32 %s21, %s28
      %s63 = sor.u32 %s61, %s62
      %p64 = scmp.eq.s32.totalorder %s63, 0
      %s66 = sadd.s32 %s65, 1
      %s67 = scalar_select %p64, %s65, %s66
      %p70 = pneg %p64
      %p71 = scmp.eq.s32.totalorder %s13, 1
      %p72 = por %p70, %p71
      %p73 = scmp.ne.s32.totalorder %s65, %s68
      %p74 = scmp.eq.s32.totalorder %s13, 0
      %p75 = por %p73, %p74
      %p76 = scmp.ne.s32.totalorder %s65, %s68
      %p77 = scmp.eq.s32.totalorder %s18, 1
      %p78 = por %p76, %p77
      %p79 = scmp.ne.s32.totalorder %s68, %s69
      %p80 = scmp.eq.s32.totalorder %s18, 0
      %p81 = por %p79, %p80
      %p82 = scmp.ne.s32.totalorder %s68, %s69
      %p83 = scmp.eq.s32.totalorder %s19, 1
      %p84 = por %p82, %p83
      %p86 = scmp.ne.s32.totalorder %s69, %s85
      %p87 = scmp.eq.s32.totalorder %s19, 0
      %p88 = por %p86, %p87
      %p89 = scmp.le.s32.totalorder 1, %s13
      %p90 = scmp.lt.s32.totalorder %s13, 3
      %p91 = pnand %p89, %p90
      %p92 = pneg %p91
      // Predicated region
      $region9: #{tpu_custom_call.1} parent=5 // pred_check
        _
      $region10: #{tpu_custom_call.1} parent=5 // pred_check_branch
        %94 = sbr.rel (%p91) target = $region12
      $region11: #{tpu_custom_call.1} parent=5 // pred_region
        %s95 = ssub.s32 %s13, 1
      $region12: #{tpu_custom_call.1} parent=5 // pred_fallthru
        _
      %p96 = scmp.lt.s32.totalorder %s13, 2
      // Predicated region
      $region13: #{tpu_custom_call.1} parent=5 // pred_check
        %p97 = pneg %p96
      $region14: #{tpu_custom_call.1} parent=5 // pred_check_branch
        %99 = sbr.rel (%p97) target = $region16
      $region15: #{tpu_custom_call.1} parent=5 // pred_region
        // Predicated region
        $region17: #{tpu_custom_call.1} parent=15 // pred_check
          %p100 = pneg %p47
        $region18: #{tpu_custom_call.1} parent=15 // pred_check_branch
          %102 = sbr.rel (%p100) target = $region20
        $region19: #{tpu_custom_call.1} parent=15 // pred_region
          %s103 = sand.u32 %s37, 1
          %s104 = scalar_lea.sflag [#allocation3], %s103
          %s105 = sand.u32 %s37, 1
          %s106 = smul.addr %s105, 4
          %s107 = scalar_lea.vmem [#allocation2], %s106
          %s109 = ssub.s32 64, 64
          %110 = vsyncadd %s104, %s109
          %s111 = smul.addr %s20, 2
          %s112 = sadd.s32 %s21, %s111
          %s113 = smul.addr %s112, 32
          %s114 = scalar_lea.hbm %s0, %s113
          %s115 = sshll.u32 %s107, 4
          %s116 = int_to_ptr.vmem [resolvable:$true] %s115
          %121 = dma.hbm_to_vmem [thread:$0]  %s114, 64, %s116, %s104, 32, 32, 2
        $region20: #{tpu_custom_call.1} parent=15 // pred_fallthru
          _
      $region16: #{tpu_custom_call.1} parent=5 // pred_fallthru
        _
      %p122 = scmp.le.s32.totalorder 1, %s13
      %p123 = scmp.lt.s32.totalorder %s13, 3
      %p124 = pnand %p122, %p123
      %p125 = pneg %p124
      // Predicated region
      $region21: #{tpu_custom_call.1} parent=5 // pred_check
        _
      $region22: #{tpu_custom_call.1} parent=5 // pred_check_branch
        %127 = sbr.rel (%p124) target = $region24
      $region23: #{tpu_custom_call.1} parent=5 // pred_region
        %s128 = ssub.s32 %s13, 1
        %s129 = sand.u32 %s40, 1
        %s130 = scalar_lea.sflag [#allocation3], %s129
        %s131 = sand.u32 %s40, 1
        %s132 = smul.addr %s131, 4
        %s133 = scalar_lea.vmem [#allocation2], %s132
        // Predicated region
        $region25: #{tpu_custom_call.1} parent=23 // pred_check
          %p134 = pneg %p53
        $region26: #{tpu_custom_call.1} parent=23 // pred_check_branch
          %136 = sbr.rel (%p134) target = $region28
        $region27: #{tpu_custom_call.1} parent=23 // pred_region
          %137 = dma.done %s130, 64
        $region28: #{tpu_custom_call.1} parent=23 // pred_fallthru
          _
        %s138 = sand.u32 %s40, 1
        %s139 = scalar_lea.sflag [#allocation3], %s138
        %s140 = sand.u32 %s40, 1
        %s141 = smul.addr %s140, 4
        %s142 = scalar_lea.vmem [#allocation2], %s141
        %p143 = pneg %p53
        %p144 = pneg %p50
        %p145 = pneg %p81
        %p146 = pneg %p78
        %s147 = sand.u32 %s68, 1
        %s148 = scalar_lea.sflag [#allocation4], %s147
        %s149 = sand.u32 %s68, 1
        %s150 = smul.addr %s149, 4
        %s151 = scalar_lea.vmem [#allocation5], %s150
        %v152 = vld [vmem:[%s133] sm:$0x3]
        %v153 = vld [vmem:[%s133 + $0x2] sm:$0x3]
        %v154 = vmul.f32 %v152, %v152
        %v155 = vmul.f32 %v153, %v153
        %v156 = vadd.f32 %v154, %v155
        %v157 = vrsqrt.pop %v156
        %v158 = vmul.f32 %v156, %v157
        %vm159 = vcmp.eq.f32.partialorder %v156, inf
        %v160 = vsel %vm159, %v156, %v158
        %vm161 = vcmp.eq.f32.partialorder %v156, 0.0
        %v162 = vand.u32 %v156, 2147483648
        %v163 = vsel %vm161, %v162, %v160
        %v164 = vand.u32 2147483647, %v152
        %v165 = vand.u32 2147483647, %v153
        %v166 = vmin.f32 %v164, %v165
        %v167 = vmax.f32 %v164, %v165
        %v168 = vrcp.pop %v167
        %v169 = vmul.f32 %v166, %v168
        %v170 = vmul.f32 %v169, %v169
        %v171 = vmul.f32 0.002785687, %v170
        %v172 = vadd.f32 %v171, -0.015866
        %v173 = vmul.f32 %v172, %v170
        %v174 = vadd.f32 %v173, 0.04247222
        %v175 = vmul.f32 %v174, %v170
        %v176 = vadd.f32 %v175, -0.074975304
        %v177 = vmul.f32 %v176, %v170
        %v178 = vadd.f32 %v177, 0.1064488
        %v179 = vmul.f32 %v178, %v170
        %v180 = vadd.f32 %v179, -0.14207031
        %v181 = vmul.f32 %v180, %v170
        %v182 = vadd.f32 %v181, 0.19993454
        %v183 = vmul.f32 %v182, %v170
        %v184 = vadd.f32 %v183, -0.33333147
        %v185 = vmul.f32 %v184, %v170
        %v186 = vmul.f32 %v185, %v169
        %v187 = vadd.f32 %v186, %v169
        %vm188 = vcmp.gt.f32.partialorder %v165, %v164
        %v189 = vsub.f32 1.5707964, %v187
        %v190 = vsel %vm188, %v189, %v187
        %vm191 = vcmp.lt.f32.partialorder %v152, 0.0
        %v192 = vsub.f32 3.1415927, %v190
        %v193 = vsel %vm191, %v192, %v190
        %vm194 = vcmp.lt.s32.totalorder %v152, 0
        %v195 = vsel %vm194, 3.1415927, 0.0
        %vm196 = vcmp.eq.f32.partialorder %v153, 0.0
        %v197 = vsel %vm196, %v195, %v193
        %vm198 = vcmp.ne.f32.partialorder %v152, %v152
        %vm199 = vcmp.ne.f32.partialorder %v153, %v153
        %vm200 = vmor %vm198, %vm199
        %v201 = vsel %vm200, nan, %v197
        %vm202 = vcmp.lt.f32.partialorder %v152, 0.0
        %v203 = vsel %vm202, 2.3561945, 0.7853982
        %vm204 = vcmp.eq.s32.totalorder %v164, inf
        %vm205 = vcmp.eq.s32.totalorder %v165, inf
        %vm206 = vmand %vm204, %vm205
        %v207 = vsel %vm206, %v203, %v201
        %v208 = vand.u32 2147483647, %v207
        %v209 = vand.u32 %v153, 2147483648
        %v210 = vor.u32 %v208, %v209
        %v211 = vadd.f32 %v163, -1.5
        %v212 = vrcp.pop 2.0
        %v213 = vmul.f32 %v211, %v212
        %v214 = vceil.f32 %v213
        %v215 = vmul.f32 %v214, 6.2831855
        %v216 = vsub.f32 %v210, %v215
        %217 = vst [vmem:[%s151] sm:$0x3] %v163
        %218 = vst [vmem:[%s151 + $0x2] sm:$0x3] %v216
        %s219 = sand.u32 %s68, 1
        %s220 = scalar_lea.sflag [#allocation4], %s219
        %s221 = sand.u32 %s68, 1
        %s222 = smul.addr %s221, 4
        %s223 = scalar_lea.vmem [#allocation5], %s222
        // Predicated region
        $region29: #{tpu_custom_call.1} parent=23 // pred_check
          %p224 = pneg %p78
        $region30: #{tpu_custom_call.1} parent=23 // pred_check_branch
          %226 = sbr.rel (%p224) target = $region32
        $region31: #{tpu_custom_call.1} parent=23 // pred_region
          %s228 = ssub.s32 64, 64
          %229 = vsyncadd %s220, %s228
          %s230 = smul.addr %s22, 2
          %s231 = sadd.s32 %s23, %s230
          %s232 = smul.addr %s231, 32
          %s233 = scalar_lea.hbm %s1, %s232
          %s234 = sshll.u32 %s223, 4
          %s235 = int_to_ptr.vmem [resolvable:$true] %s234
          %240 = dma.vmem_to_hbm [thread:$0]  %s235, 64, %s233, %s220, 32, 32, 2
        $region32: #{tpu_custom_call.1} parent=23 // pred_fallthru
          _
      $region24: #{tpu_custom_call.1} parent=5 // pred_fallthru
        _
      %p241 = scmp.le.s32.totalorder 2, %s13
      // Predicated region
      $region33: #{tpu_custom_call.1} parent=5 // pred_check
        %p242 = pneg %p241
      $region34: #{tpu_custom_call.1} parent=5 // pred_check_branch
        %244 = sbr.rel (%p242) target = $region36
      $region35: #{tpu_custom_call.1} parent=5 // pred_region
        %s245 = ssub.s32 %s13, 2
        // Predicated region
        $region37: #{tpu_custom_call.1} parent=35 // pred_check
          %p246 = pneg %p84
        $region38: #{tpu_custom_call.1} parent=35 // pred_check_branch
          %248 = sbr.rel (%p246) target = $region40
        $region39: #{tpu_custom_call.1} parent=35 // pred_region
          %s249 = sand.u32 %s69, 1
          %s250 = scalar_lea.sflag [#allocation4], %s249
          %s251 = sand.u32 %s69, 1
          %s252 = smul.addr %s251, 4
          %s253 = scalar_lea.vmem [#allocation5], %s252
          %254 = dma.done %s250, 64
        $region40: #{tpu_custom_call.1} parent=35 // pred_fallthru
          _
      $region36: #{tpu_custom_call.1} parent=5 // pred_fallthru
        _
    $region6: #{tpu_custom_call.1} parent=1 // loop_footer
      %s17 = sadd.s32 1, %s13
    $region7: #{tpu_custom_call.1} parent=1 // loop_footer_branch
      %12 = sbr.rel target = $region3
    $region8: #{tpu_custom_call.1} parent=1 // loop_exit
      _
    %255 = vsyncpa [#allocation3], 1
    %s256 = scalar_lea.sflag [#allocation3], 1
    %257 = vsyncpa %s256, 1
    %258 = vsyncpa [#allocation4], 1
    %s259 = scalar_lea.sflag [#allocation4], 1
    %260 = vsyncpa %s259, 1

</llo_original>
